<compile_context>
chip_gen: v6e
topology: v6e:2x2x1
jax: 0.10.0
libtpu: 0.0.40
codegen_flags: <defaults>
</compile_context>

<pallas_src>
import functools
import math

import jax
import jax.numpy as jnp
from jax.experimental import pallas as pl
from jax.experimental.pallas import tpu as pltpu


_DEF_BLOCK_BYTES = 4 * 1024 * 1024     # per-array block footprint target (~4 MiB)
_VMEM_LIMIT = 32 * 1024 * 1024         # 2 bufs x (in + out) x 4 MiB = 16 MiB + headroom


def _round_up(n, m):
    return ((n + m - 1) // m) * m


def softclamp_kernel(x_ref, o_ref, *, scale, min_val, use_fast):
    x = x_ref[...].astype(jnp.float32)
    if use_fast:
        # softplus(scale - softplus(x)) == log1p(exp(scale) * sigmoid(-x))
        # Stable for all x: sigmoid(-x) built from e = exp(-|x|) in (0, 1].
        exp_scale = math.exp(scale)                  # Python-time constant
        e = jnp.exp(-jnp.abs(x))
        denom = 1.0 + e
        inv = pl.reciprocal(denom, approx=True)      # single EUP vrcp push
        inv = inv * (2.0 - denom * inv)              # Newton step (VPU) -> full f32 accuracy
        sig_negx = jnp.where(x >= 0, e * inv, inv)   # sigmoid(-x)
        out = jnp.log1p(exp_scale * sig_negx) + min_val
    else:
        # Fallback for very large scale (exp(scale) would overflow f32):
        # stable two-softplus composition.
        sp = jnp.maximum(x, 0.0) + jnp.log1p(jnp.exp(-jnp.abs(x)))
        y = scale - sp
        out = jnp.maximum(y, 0.0) + jnp.log1p(jnp.exp(-jnp.abs(y))) + min_val
    o_ref[...] = out.astype(o_ref.dtype)


def _choose_layout(total, itemsize, block_bytes):
    """Lane-dense 2D view + block rows. Returns (lane, padded_total, rows, block_rows)."""
    lane = next((l for l in (1024, 512, 256, 128) if total % l == 0), 0)
    if lane == 0:                        # truly ragged size: pad just the flat tail
        lane = 1024
        padded_total = _round_up(total, lane)
    else:
        padded_total = total
    rows = padded_total // lane
    sub = max(8, 32 // itemsize)         # sublane packing multiple for this dtype
    target_rows = max(sub, block_bytes // (lane * itemsize))
    if rows <= sub:
        br = rows                        # block == full extent in this dim (always legal)
    else:
        br = min(_round_up(target_rows, sub), _round_up(rows, sub))
        if br >= rows and rows >= 2 * sub:
            # Guarantee >= 2 grid steps so "parallel" can shard over both v7x TCs.
            br = _round_up(-(-rows // 2), sub)
    return lane, padded_total, rows, br


@functools.partial(jax.jit, static_argnames=("min_val", "max_val", "block_bytes"))
def soft_clamp(x, *, min_val=0.0, max_val=1.0, block_bytes=_DEF_BLOCK_BYTES):
    """SoftClamp forward. Elementwise; any input shape/layout. min/max are static floats."""
    if not jnp.issubdtype(x.dtype, jnp.floating):
        raise ValueError(f"soft_clamp expects a floating dtype, got {x.dtype}")

    scale = float(max_val) - float(min_val)
    use_fast = scale <= 80.0             # exp(80) ~ 5.5e34 stays finite in f32

    orig_shape = x.shape
    total = x.size
    itemsize = jnp.dtype(x.dtype).itemsize
    lane, padded_total, rows, br = _choose_layout(total, itemsize, block_bytes)

    flat = x.reshape(-1)
    if padded_total != total:
        flat = jnp.pad(flat, (0, padded_total - total))
    x2 = flat.reshape(rows, lane)

    grid_n = -(-rows // br)              # partial last block is masked by Pallas
    kernel = functools.partial(
        softclamp_kernel, scale=scale, min_val=float(min_val), use_fast=use_fast)

    cost = pl.CostEstimate(
        flops=10 * padded_total,
        transcendentals=3 * padded_total,
        bytes_accessed=2 * padded_total * itemsize)

    out2 = pl.pallas_call(
        kernel,
        out_shape=jax.ShapeDtypeStruct((rows, lane), x.dtype),
        grid_spec=pltpu.PrefetchScalarGridSpec(
            num_scalar_prefetch=0,
            grid=(grid_n,),
            in_specs=[pl.BlockSpec((br, lane), lambda i: (i, 0))],
            out_specs=pl.BlockSpec((br, lane), lambda i: (i, 0)),
        ),
        compiler_params=pltpu.CompilerParams(
            dimension_semantics=("parallel",),
            vmem_limit_bytes=_VMEM_LIMIT,
        ),
        cost_estimate=cost,
    )(x2)

    out_flat = out2.reshape(-1)
    if padded_total != total:
        out_flat = out_flat[:total]
    return out_flat.reshape(orig_shape)


def soft_clamp_ref(x, min_val=0.0, max_val=1.0):
    scale = max_val - min_val
    return jax.nn.softplus(-(jax.nn.softplus(x) - scale)) + min_val


if __name__ == "__main__":
    # Main test: NCHW input like the PyTorch module would see.
    x = jax.random.normal(jax.random.PRNGKey(0), (2, 4, 16, 16), dtype=jnp.float32) * 3.0
    out = soft_clamp(x, min_val=0.0, max_val=1.0)
    jax.block_until_ready(out)
    ref = soft_clamp_ref(x, 0.0, 1.0)
    assert out.shape == x.shape and out.dtype == x.dtype
    assert jnp.allclose(out, ref, atol=1e-5, rtol=1e-5), "mismatch vs reference (main)"

    # Ragged size + non-default clamp range: exercises the padded-tail path.
    x_odd = jax.random.normal(jax.random.PRNGKey(1), (3, 5, 7, 9), dtype=jnp.float32) * 3.0
    out_odd = soft_clamp(x_odd, min_val=-0.5, max_val=2.0)
    jax.block_until_ready(out_odd)
    ref_odd = soft_clamp_ref(x_odd, -0.5, 2.0)
    assert out_odd.shape == x_odd.shape and out_odd.dtype == x_odd.dtype
    assert jnp.allclose(out_odd, ref_odd, atol=1e-5, rtol=1e-5), "mismatch vs reference (odd)"

    # Multi-block grid (>= 2 steps) on a modest tensor.
    x_mid = jax.random.normal(jax.random.PRNGKey(2), (2, 8, 64, 64), dtype=jnp.float32) * 3.0
    out_mid = soft_clamp(x_mid, min_val=0.0, max_val=1.0)
    jax.block_until_ready(out_mid)
    ref_mid = soft_clamp_ref(x_mid, 0.0, 1.0)
    assert jnp.allclose(out_mid, ref_mid, atol=1e-5, rtol=1e-5), "mismatch vs reference (mid)"

    # Very large clamp range: exercises the two-softplus fallback path (scale > 80).
    x_big = jax.random.normal(jax.random.PRNGKey(3), (4, 128), dtype=jnp.float32) * 3.0
    out_big = soft_clamp(x_big, min_val=-10.0, max_val=80.0)
    jax.block_until_ready(out_big)
    ref_big = soft_clamp_ref(x_big, -10.0, 80.0)
    assert jnp.allclose(out_big, ref_big, atol=1e-5, rtol=1e-5), "mismatch vs reference (big)"

    print("KERNEL_OK")
</pallas_src>

<mosaic_0001>
module attributes {stable_mosaic.version = 11 : i64} {
  func.func @softclamp_kernel(%arg0: i32, %arg1: memref<2x1024xf32, #tpu.memory_space<vmem>>, %arg2: memref<2x1024xf32, #tpu.memory_space<vmem>>) attributes {dimension_semantics = [#tpu.dimension_semantics<parallel>], iteration_bounds = array<i64: 1>, scalar_prefetch = 0 : i64, scratch_operands = 0 : i64, tpu.core_type = #tpu.core_type<tc>, window_params = [{transform_indices = @transform_0, window_bounds = array<i64: 2, 1024>}, {transform_indices = @transform_1, window_bounds = array<i64: 2, 1024>}]} {
    %c0 = arith.constant 0 : index
    %c0_0 = arith.constant 0 : index
    %0 = vector.load %arg1[%c0, %c0_0] : memref<2x1024xf32, #tpu.memory_space<vmem>>, vector<2x1024xf32>
    %1 = math.absf %0 : vector<2x1024xf32>
    %cst = arith.constant 0.000000e+00 : f32
    %2 = vector.broadcast %cst : f32 to vector<2x1024xf32>
    %3 = arith.subf %2, %1 : vector<2x1024xf32>
    %4 = math.exp %3 : vector<2x1024xf32>
    %cst_1 = arith.constant 1.000000e+00 : f32
    %5 = vector.broadcast %cst_1 : f32 to vector<2x1024xf32>
    %6 = arith.addf %5, %4 : vector<2x1024xf32>
    %7 = tpu.reciprocal %6 {approx = true} : vector<2x1024xf32> -> vector<2x1024xf32>
    %8 = arith.mulf %6, %7 : vector<2x1024xf32>
    %cst_2 = arith.constant 2.000000e+00 : f32
    %9 = vector.broadcast %cst_2 : f32 to vector<2x1024xf32>
    %10 = arith.subf %9, %8 : vector<2x1024xf32>
    %11 = arith.mulf %7, %10 : vector<2x1024xf32>
    %cst_3 = arith.constant 0.000000e+00 : f32
    %12 = vector.broadcast %cst_3 : f32 to vector<2x1024xf32>
    %13 = arith.cmpf oge, %0, %12 : vector<2x1024xf32>
    %14 = arith.mulf %4, %11 : vector<2x1024xf32>
    %15 = arith.select %13, %14, %11 : vector<2x1024xi1>, vector<2x1024xf32>
    %cst_4 = arith.constant 2.71828175 : f32
    %16 = vector.broadcast %cst_4 : f32 to vector<2x1024xf32>
    %17 = arith.mulf %16, %15 : vector<2x1024xf32>
    %18 = math.log1p %17 : vector<2x1024xf32>
    %cst_5 = arith.constant 0.000000e+00 : f32
    %19 = vector.broadcast %cst_5 : f32 to vector<2x1024xf32>
    %20 = arith.addf %18, %19 : vector<2x1024xf32>
    %c0_6 = arith.constant 0 : index
    %c0_7 = arith.constant 0 : index
    %21 = vector.load %arg2[%c0_6, %c0_7] : memref<2x1024xf32, #tpu.memory_space<vmem>>, vector<2x1024xf32>
    tpu.vector_store %arg2[%c0_6, %c0_7], %20 {strides = array<i32>} : memref<2x1024xf32, #tpu.memory_space<vmem>>, vector<2x1024xf32>,
    return
  }
  func.func @transform_0(%arg0: i32) -> (i32, i32) {
    %c0_i32 = arith.constant 0 : i32
    %c0_i32_0 = arith.constant 0 : i32
    return %arg0, %c0_i32 : i32, i32
  }
  func.func @transform_1(%arg0: i32) -> (i32, i32) {
    %c0_i32 = arith.constant 0 : i32
    %c0_i32_0 = arith.constant 0 : i32
    return %arg0, %c0_i32 : i32, i32
  }
}

</mosaic_0001>

<llo_original>
// kernel: soft_clamp.1
$region0: #{soft_clamp.1}
  #allocation0 [shape = 'u32[]', space=smem, size = 0x4, offset = 0x4, fixed_abs, tag = 'smem constant byte address 0x4 - core index']
  #allocation1 [shape = 'u32[144,128]{1,0:T(1,128)}', space=vmem, size = 0x12000, scoped, tag = 'internal scratch']
  %s0 = inlined_call_operand.vmem [shape: f32[2,1024], index: 0, kind: input, shape index: {}]
  %s1 = inlined_call_operand.vmem [shape: f32[2,1024], index: 1, kind: output, shape index: {}]
  %s2 = sld [smem:[#allocation0]]
  $region14: #{soft_clamp.1} parent=0
    _
  %s4 = ssub.s32 1, %s2
  %s5 = scalar_select 0, %s4, %s2
  // Predicated region
  $region2: #{soft_clamp.1} parent=0 // pred_check
    _
  $region3: #{soft_clamp.1} parent=0 // pred_check_branch
    %7 = sbr.rel (0) target = $region5
  $region4: #{soft_clamp.1} parent=0 // pred_region
    _
  $region5: #{soft_clamp.1} parent=0 // pred_fallthru
    _
  %v8 = vld [vmem:[%s0] sm:$0xff]
  %v9 = vld [vmem:[%s0 + $0x8] sm:$0xff]
  %v10 = vand.u32 2147483647, %v8
  %v11 = vand.u32 2147483647, %v9
  %v12 = vsub.f32 0.0, %v10
  %v13 = vsub.f32 0.0, %v11
  %v14 = vmul.f32 %v12, 1.442695
  %v15 = vpow.pop %v14
  %v16 = vmul.f32 %v13, 1.442695
  %v17 = vpow.pop %v16
  %v18 = vadd.f32 %v15, 1.0
  %v19 = vadd.f32 %v17, 1.0
  %v20 = vrcp.pop %v18
  %v21 = vrcp.pop %v19
  %v22 = vmul.f32 %v18, %v20
  %v23 = vmul.f32 %v19, %v21
  %v24 = vsub.f32 2.0, %v22
  %v25 = vsub.f32 2.0, %v23
  %v26 = vmul.f32 %v20, %v24
  %v27 = vmul.f32 %v21, %v25
  %vm28 = vcmp.ge.f32.partialorder %v8, 0.0
  %vm29 = vcmp.ge.f32.partialorder %v9, 0.0
  %v30 = vmul.f32 %v15, %v26
  %v31 = vmul.f32 %v17, %v27
  %v32 = vsel %vm28, %v30, %v26
  %v33 = vsel %vm29, %v31, %v27
  %v34 = vmul.f32 %v32, 2.7182817
  %v35 = vmul.f32 %v33, 2.7182817
  %v36 = vadd.f32 %v34, 1.0
  %v37 = vlog2.pop %v36
  %v38 = vmul.f32 %v37, 0.6931472
  %v39 = vmul.f32 -0.5, %v34
  %v40 = vadd.f32 %v39, 1.0
  %v41 = vmul.f32 %v40, %v34
  %v42 = vand.u32 2147483647, %v34
  %vm43 = vcmp.lt.f32.partialorder %v42, 0.0004427343
  %v44 = vsel %vm43, %v41, %v38
  %v45 = vadd.f32 %v35, 1.0
  %v46 = vlog2.pop %v45
  %v47 = vmul.f32 %v46, 0.6931472
  %v48 = vmul.f32 -0.5, %v35
  %v49 = vadd.f32 %v48, 1.0
  %v50 = vmul.f32 %v49, %v35
  %v51 = vand.u32 2147483647, %v35
  %vm52 = vcmp.lt.f32.partialorder %v51, 0.0004427343
  %v53 = vsel %vm52, %v50, %v47
  %v54 = vadd.f32 %v44, 0.0
  %v55 = vadd.f32 %v53, 0.0
  %56 = vst [vmem:[%s1] sm:$0xff] %v54
  %57 = vst [vmem:[%s1 + $0x8] sm:$0xff] %v55
  // Predicated region
  $region6: #{soft_clamp.1} parent=0 // pred_check
    _
  $region7: #{soft_clamp.1} parent=0 // pred_check_branch
    %59 = sbr.rel (0) target = $region9
  $region8: #{soft_clamp.1} parent=0 // pred_region
    _
  $region9: #{soft_clamp.1} parent=0 // pred_fallthru
    _
  // Predicated region
  $region10: #{soft_clamp.1} parent=0 // pred_check
    _
  $region11: #{soft_clamp.1} parent=0 // pred_check_branch
    %61 = sbr.rel (0) target = $region13
  $region12: #{soft_clamp.1} parent=0 // pred_region
    _
  $region13: #{soft_clamp.1} parent=0 // pred_fallthru
    _

</llo_original>
